<compile_context>
chip_gen: v7x
topology: tpu7x:2x2x1
jax: 0.10.0
libtpu: 0.0.40
codegen_flags: <defaults>
</compile_context>

<pallas_src>
import functools

import jax
import jax.numpy as jnp
import numpy as np
from jax.experimental import pallas as pl
from jax.experimental.pallas import tpu as pltpu


def _round_up(x, m):
    return (x + m - 1) // m * m


def _make_kernel(num_features, sqrt_gammas):
    """Build the fused kernel for a fixed feature layout.

    Kernel refs layout:
      refs[0]                       x_ref        [F, tile_n]   f32 (atoms on lanes)
      refs[1 : 1+F]                 cs_refs[f]   [nc_f, 1]     f32 (= sqrt(gamma_f)*centers_f)
      refs[1+F : 1+2F]              w_refs[f]    [D, nc_f]     mxu_dtype (nn.Linear weight)
      refs[1+2F]                    b_ref        [D, 1]        f32 (sum of all biases)
      refs[2+2F]                    out_ref      [D, tile_n]   out_dtype
    """
    sgs = tuple(float(g) for g in sqrt_gammas)
    F = int(num_features)

    def kernel(*refs):
        x_ref = refs[0]
        cs_refs = refs[1:1 + F]
        w_refs = refs[1 + F:1 + 2 * F]
        b_ref = refs[1 + 2 * F]
        out_ref = refs[2 + 2 * F]

        acc = None
        for f in range(F):
            # [1, tile_n] row of this feature, pre-scaled by sqrt(gamma_f).
            xr = x_ref[f:f + 1, :] * sgs[f]
            # Broadcast against the [nc_f, 1] scaled centers -> [nc_f, tile_n].
            d = xr - cs_refs[f][...]
            # exp(-gamma*(x-c)^2) in f32 on the EUP; exact nc_f rows (no padding).
            p = jnp.exp(-(d * d))
            # Cast only the MXU operand (bf16 by default); accumulate in f32.
            p = p.astype(w_refs[f].dtype)
            t = jnp.dot(w_refs[f][...], p,
                        preferred_element_type=jnp.float32)      # [D, tile_n]
            acc = t if acc is None else acc + t

        # Single summed bias, lane-broadcast add (hidden under the HBM store).
        out_ref[...] = (acc + b_ref[...]).astype(out_ref.dtype)

    return kernel


def atom_float_embedding(x_fn, centers_list, gammas, w_list, b_list, *,
                         tile_n=None, mxu_dtype=jnp.bfloat16,
                         out_dtype=jnp.float32, transpose_output=True):
    """Fused AtomFloatEmbedding forward.

    Args:
      x_fn:          [F, N] float32 — one row per atom float feature (atoms on lanes).
      centers_list:  F arrays of RBF centers, shapes [nc_f].
      gammas:        F python floats (RBF gamma per feature).
      w_list:        F nn.Linear weights, shapes [D, nc_f].
      b_list:        F nn.Linear biases, shapes [D].
      tile_n:        atom-axis tile width; None = auto (single tile for small N,
                     ~4K tiles with an even grid for large N).
      mxu_dtype:     dtype of the matmul operands (bf16 default, f32 for exactness).
      out_dtype:     output dtype (use bf16 if the consumer tolerates it to halve
                     the dominant HBM write traffic).
      transpose_output: True -> [N, D] (PyTorch layout, extra XLA transpose pass);
                        False -> [D, N] lane-dense kernel layout (preferred for fusion).
    """
    F, N = x_fn.shape
    D = int(w_list[0].shape[0])
    ncs = [int(np.shape(c)[0]) for c in centers_list]
    sqrt_gammas = [float(np.sqrt(g)) for g in gammas]

    # ---- parameter prep (in production, do this once at module-init time) ----
    cs_scaled = [(sqrt_gammas[f] * jnp.asarray(centers_list[f], jnp.float32)
                  ).reshape(ncs[f], 1) for f in range(F)]
    w_cast = [jnp.asarray(w_list[f]).astype(mxu_dtype) for f in range(F)]
    bias_sum = sum(jnp.asarray(b, jnp.float32) for b in b_list).reshape(D, 1)

    # ---- atom-axis tiling -----------------------------------------------------
    n128 = _round_up(N, 128)
    if tile_n is None:
        max_tile = 4096                      # large enough to amortize ~0.35us/step
        n_tiles = -(-n128 // max_tile)
        if n_tiles > 1:
            n_tiles = 2 * (-(-n_tiles // 2))  # even #steps -> both v7x TensorCores
        tile_n = _round_up(-(-n128 // n_tiles), 128)
    else:
        tile_n = max(128, _round_up(min(int(tile_n), n128), 128))
    n_pad = -(-N // tile_n) * tile_n
    grid_n = n_pad // tile_n
    if n_pad != N:
        x_fn = jnp.pad(x_fn, ((0, 0), (0, n_pad - N)))

    # ---- specs ------------------------------------------------------------------
    in_specs = [pl.BlockSpec((F, tile_n), lambda i: (0, i))]            # x: walk atoms
    in_specs += [pl.BlockSpec((nc, 1), lambda i: (0, 0)) for nc in ncs]  # centers (resident)
    in_specs += [pl.BlockSpec((D, nc), lambda i: (0, 0)) for nc in ncs]  # weights (resident)
    in_specs += [pl.BlockSpec((D, 1), lambda i: (0, 0))]                 # summed bias (resident)
    out_spec = pl.BlockSpec((D, tile_n), lambda i: (0, i))               # lane-dense output

    total_c = sum(ncs)
    cost = pl.CostEstimate(
        flops=int(2 * n_pad * total_c * D),
        transcendentals=int(n_pad * total_c),
        bytes_accessed=int(4 * F * n_pad + 4 * total_c
                           + np.dtype(mxu_dtype).itemsize * D * total_c + 4 * D
                           + np.dtype(out_dtype).itemsize * D * n_pad))

    out_dn = pl.pallas_call(
        _make_kernel(F, sqrt_gammas),
        out_shape=jax.ShapeDtypeStruct((D, n_pad), out_dtype),
        grid=(grid_n,),
        in_specs=in_specs,
        out_specs=out_spec,
        compiler_params=pltpu.CompilerParams(
            dimension_semantics=("parallel",)),
        cost_estimate=cost,
    )(x_fn, *cs_scaled, *w_cast, bias_sum)

    out_dn = out_dn[:, :N]
    if transpose_output:
        return out_dn.T          # [N, D] — PyTorch layout (extra XLA transpose pass)
    return out_dn                # [D, N] — fusion-friendly, avoids re-touching HBM


if __name__ == "__main__":
    # --- module configuration (matches AtomFloatEmbedding defaults) ---
    atom_float_names = ["van_der_waals_radis", "partial_charge", "mass"]
    embed_dim = 32
    rbf_params = {
        "van_der_waals_radis": (np.arange(1.0, 3.0, 0.2, dtype=np.float32), 10.0),
        "partial_charge": (np.arange(-1.0, 4.0, 0.25, dtype=np.float32), 10.0),
        "mass": (np.arange(0.0, 2.0, 0.1, dtype=np.float32), 10.0),
    }
    F = len(atom_float_names)
    D = embed_dim
    N = 300                       # atoms; auto-tiling uses ONE 384-wide tile

    key = jax.random.PRNGKey(0)
    k_feats, k_w, k_b = jax.random.split(key, 3)
    feat_keys = jax.random.split(k_feats, F)
    w_keys = jax.random.split(k_w, F)
    b_keys = jax.random.split(k_b, F)

    centers_list, gammas, w_list, b_list = [], [], [], []
    for f, name in enumerate(atom_float_names):
        c, g = rbf_params[name]
        centers_list.append(jnp.asarray(c))
        gammas.append(float(g))
        w_list.append(jax.random.uniform(w_keys[f], (D, len(c)), jnp.float32, -0.1, 0.1))
        b_list.append(jax.random.uniform(b_keys[f], (D,), jnp.float32, -0.1, 0.1))

    # --- example inputs: feats dict of per-atom scalar features ---
    feats = {name: jax.random.uniform(feat_keys[f], (N,), jnp.float32, 0.0, 2.0)
             for f, name in enumerate(atom_float_names)}
    x_fn = jnp.stack([feats[name] for name in atom_float_names], axis=0)   # [F, N]

    # --- run fused kernel (default: bf16 MXU operands, PyTorch [N, D] layout) ---
    out = atom_float_embedding(x_fn, centers_list, gammas, w_list, b_list)
    out = jax.block_until_ready(out)

    # --- also exercise the fusion-friendly path: exact f32 MXU, [D, N] output ---
    out_dn = atom_float_embedding(x_fn, centers_list, gammas, w_list, b_list,
                                  mxu_dtype=jnp.float32, transpose_output=False)
    out_dn = jax.block_until_ready(out_dn)

    # --- plain-JAX reference (mirrors the PyTorch forward) ---
    ref = jnp.zeros((N, D), jnp.float32)
    for f, name in enumerate(atom_float_names):
        c, g = rbf_params[name]
        x = feats[name].reshape(-1, 1)                                 # [N, 1]
        rbf = jnp.exp(-g * (x - jnp.asarray(c)[None, :]) ** 2)          # [N, nc_f]
        ref = ref + rbf @ w_list[f].T + b_list[f][None, :]

    # f32-MXU path is numerically tight against the reference.
    np.testing.assert_allclose(np.asarray(out_dn).T, np.asarray(ref),
                               rtol=1e-4, atol=1e-5)
    # bf16-MXU path: weights + rbf rounded to bf16 (~0.4% per product term).
    np.testing.assert_allclose(np.asarray(out), np.asarray(ref),
                               rtol=2e-2, atol=2e-2)

    print("KERNEL_OK")
</pallas_src>

<mosaic_0001>
module attributes {stable_mosaic.version = 11 : i64} {
  func.func @kernel(%arg0: i32, %arg1: memref<3x384xf32, #tpu.memory_space<vmem>>, %arg2: memref<10x1xf32, #tpu.memory_space<vmem>>, %arg3: memref<20x1xf32, #tpu.memory_space<vmem>>, %arg4: memref<20x1xf32, #tpu.memory_space<vmem>>, %arg5: memref<32x10xbf16, #tpu.memory_space<vmem>>, %arg6: memref<32x20xbf16, #tpu.memory_space<vmem>>, %arg7: memref<32x20xbf16, #tpu.memory_space<vmem>>, %arg8: memref<32x1xf32, #tpu.memory_space<vmem>>, %arg9: memref<32x384xf32, #tpu.memory_space<vmem>>) attributes {dimension_semantics = [#tpu.dimension_semantics<parallel>], iteration_bounds = array<i64: 1>, scalar_prefetch = 0 : i64, scratch_operands = 0 : i64, tpu.core_type = #tpu.core_type<tc>, window_params = [{transform_indices = @transform_0, window_bounds = array<i64: 3, 384>}, {pipeline_mode = #tpu.pipeline_mode<synchronous>, transform_indices = @transform_1, window_bounds = array<i64: 10, 1>}, {pipeline_mode = #tpu.pipeline_mode<synchronous>, transform_indices = @transform_2, window_bounds = array<i64: 20, 1>}, {pipeline_mode = #tpu.pipeline_mode<synchronous>, transform_indices = @transform_3, window_bounds = array<i64: 20, 1>}, {pipeline_mode = #tpu.pipeline_mode<synchronous>, transform_indices = @transform_4, window_bounds = array<i64: 32, 10>}, {pipeline_mode = #tpu.pipeline_mode<synchronous>, transform_indices = @transform_5, window_bounds = array<i64: 32, 20>}, {pipeline_mode = #tpu.pipeline_mode<synchronous>, transform_indices = @transform_6, window_bounds = array<i64: 32, 20>}, {pipeline_mode = #tpu.pipeline_mode<synchronous>, transform_indices = @transform_7, window_bounds = array<i64: 32, 1>}, {transform_indices = @transform_8, window_bounds = array<i64: 32, 384>}]} {
    %c0 = arith.constant 0 : index
    %c0_0 = arith.constant 0 : index
    %0 = vector.load %arg1[%c0, %c0_0] : memref<3x384xf32, #tpu.memory_space<vmem>>, vector<1x384xf32>
    %cst = arith.constant 3.1622777 : f32
    %1 = vector.broadcast %cst : f32 to vector<1x384xf32>
    %2 = arith.mulf %0, %1 : vector<1x384xf32>
    %c0_1 = arith.constant 0 : index
    %c0_2 = arith.constant 0 : index
    %3 = vector.load %arg2[%c0_1, %c0_2] : memref<10x1xf32, #tpu.memory_space<vmem>>, vector<10x1xf32>
    %4 = vector.broadcast %2 : vector<1x384xf32> to vector<10x384xf32>
    %5 = vector.broadcast %3 : vector<10x1xf32> to vector<10x384xf32>
    %6 = arith.subf %4, %5 : vector<10x384xf32>
    %7 = arith.mulf %6, %6 : vector<10x384xf32>
    %cst_3 = arith.constant 0.000000e+00 : f32
    %8 = vector.broadcast %cst_3 : f32 to vector<10x384xf32>
    %9 = arith.subf %8, %7 : vector<10x384xf32>
    %10 = math.exp %9 : vector<10x384xf32>
    %11 = arith.truncf %10 : vector<10x384xf32> to vector<10x384xbf16>
    %c0_4 = arith.constant 0 : index
    %c0_5 = arith.constant 0 : index
    %12 = vector.load %arg5[%c0_4, %c0_5] : memref<32x10xbf16, #tpu.memory_space<vmem>>, vector<32x10xbf16>
    %cst_6 = arith.constant dense<0.000000e+00> : vector<32x384xf32>
    %13 = tpu.matmul %12, %11, %cst_6 {dimension_numbers = #tpu.dot_dimension_numbers<[1], [0], [0], [1], [0, 0, 1, 1], [], []>} : vector<32x10xbf16>, vector<10x384xbf16>, vector<32x384xf32> -> vector<32x384xf32>
    %c1 = arith.constant 1 : index
    %c0_7 = arith.constant 0 : index
    %14 = vector.load %arg1[%c1, %c0_7] : memref<3x384xf32, #tpu.memory_space<vmem>>, vector<1x384xf32>
    %cst_8 = arith.constant 3.1622777 : f32
    %15 = vector.broadcast %cst_8 : f32 to vector<1x384xf32>
    %16 = arith.mulf %14, %15 : vector<1x384xf32>
    %c0_9 = arith.constant 0 : index
    %c0_10 = arith.constant 0 : index
    %17 = vector.load %arg3[%c0_9, %c0_10] : memref<20x1xf32, #tpu.memory_space<vmem>>, vector<20x1xf32>
    %18 = vector.broadcast %16 : vector<1x384xf32> to vector<20x384xf32>
    %19 = vector.broadcast %17 : vector<20x1xf32> to vector<20x384xf32>
    %20 = arith.subf %18, %19 : vector<20x384xf32>
    %21 = arith.mulf %20, %20 : vector<20x384xf32>
    %cst_11 = arith.constant 0.000000e+00 : f32
    %22 = vector.broadcast %cst_11 : f32 to vector<20x384xf32>
    %23 = arith.subf %22, %21 : vector<20x384xf32>
    %24 = math.exp %23 : vector<20x384xf32>
    %25 = arith.truncf %24 : vector<20x384xf32> to vector<20x384xbf16>
    %c0_12 = arith.constant 0 : index
    %c0_13 = arith.constant 0 : index
    %26 = vector.load %arg6[%c0_12, %c0_13] : memref<32x20xbf16, #tpu.memory_space<vmem>>, vector<32x20xbf16>
    %cst_14 = arith.constant dense<0.000000e+00> : vector<32x384xf32>
    %27 = tpu.matmul %26, %25, %cst_14 {dimension_numbers = #tpu.dot_dimension_numbers<[1], [0], [0], [1], [0, 0, 1, 1], [], []>} : vector<32x20xbf16>, vector<20x384xbf16>, vector<32x384xf32> -> vector<32x384xf32>
    %28 = arith.addf %13, %27 : vector<32x384xf32>
    %c2 = arith.constant 2 : index
    %c0_15 = arith.constant 0 : index
    %29 = vector.load %arg1[%c2, %c0_15] : memref<3x384xf32, #tpu.memory_space<vmem>>, vector<1x384xf32>
    %cst_16 = arith.constant 3.1622777 : f32
    %30 = vector.broadcast %cst_16 : f32 to vector<1x384xf32>
    %31 = arith.mulf %29, %30 : vector<1x384xf32>
    %c0_17 = arith.constant 0 : index
    %c0_18 = arith.constant 0 : index
    %32 = vector.load %arg4[%c0_17, %c0_18] : memref<20x1xf32, #tpu.memory_space<vmem>>, vector<20x1xf32>
    %33 = vector.broadcast %31 : vector<1x384xf32> to vector<20x384xf32>
    %34 = vector.broadcast %32 : vector<20x1xf32> to vector<20x384xf32>
    %35 = arith.subf %33, %34 : vector<20x384xf32>
    %36 = arith.mulf %35, %35 : vector<20x384xf32>
    %cst_19 = arith.constant 0.000000e+00 : f32
    %37 = vector.broadcast %cst_19 : f32 to vector<20x384xf32>
    %38 = arith.subf %37, %36 : vector<20x384xf32>
    %39 = math.exp %38 : vector<20x384xf32>
    %40 = arith.truncf %39 : vector<20x384xf32> to vector<20x384xbf16>
    %c0_20 = arith.constant 0 : index
    %c0_21 = arith.constant 0 : index
    %41 = vector.load %arg7[%c0_20, %c0_21] : memref<32x20xbf16, #tpu.memory_space<vmem>>, vector<32x20xbf16>
    %cst_22 = arith.constant dense<0.000000e+00> : vector<32x384xf32>
    %42 = tpu.matmul %41, %40, %cst_22 {dimension_numbers = #tpu.dot_dimension_numbers<[1], [0], [0], [1], [0, 0, 1, 1], [], []>} : vector<32x20xbf16>, vector<20x384xbf16>, vector<32x384xf32> -> vector<32x384xf32>
    %43 = arith.addf %28, %42 : vector<32x384xf32>
    %c0_23 = arith.constant 0 : index
    %c0_24 = arith.constant 0 : index
    %44 = vector.load %arg8[%c0_23, %c0_24] : memref<32x1xf32, #tpu.memory_space<vmem>>, vector<32x1xf32>
    %45 = vector.broadcast %44 : vector<32x1xf32> to vector<32x384xf32>
    %46 = arith.addf %43, %45 : vector<32x384xf32>
    %c0_25 = arith.constant 0 : index
    %c0_26 = arith.constant 0 : index
    %47 = vector.load %arg9[%c0_25, %c0_26] : memref<32x384xf32, #tpu.memory_space<vmem>>, vector<32x384xf32>
    tpu.vector_store %arg9[%c0_25, %c0_26], %46 {strides = array<i32>} : memref<32x384xf32, #tpu.memory_space<vmem>>, vector<32x384xf32>,
    return
  }
  func.func @transform_0(%arg0: i32) -> (i32, i32) {
    %c0_i32 = arith.constant 0 : i32
    %c0_i32_0 = arith.constant 0 : i32
    return %c0_i32, %arg0 : i32, i32
  }
  func.func @transform_1(%arg0: i32) -> (i32, i32) {
    %c0_i32 = arith.constant 0 : i32
    %c0_i32_0 = arith.constant 0 : i32
    %c0_i32_1 = arith.constant 0 : i32
    return %c0_i32, %c0_i32_0 : i32, i32
  }
  func.func @transform_2(%arg0: i32) -> (i32, i32) {
    %c0_i32 = arith.constant 0 : i32
    %c0_i32_0 = arith.constant 0 : i32
    %c0_i32_1 = arith.constant 0 : i32
    return %c0_i32, %c0_i32_0 : i32, i32
  }
  func.func @transform_3(%arg0: i32) -> (i32, i32) {
    %c0_i32 = arith.constant 0 : i32
    %c0_i32_0 = arith.constant 0 : i32
    %c0_i32_1 = arith.constant 0 : i32
    return %c0_i32, %c0_i32_0 : i32, i32
  }
  func.func @transform_4(%arg0: i32) -> (i32, i32) {
    %c0_i32 = arith.constant 0 : i32
    %c0_i32_0 = arith.constant 0 : i32
    %c0_i32_1 = arith.constant 0 : i32
    return %c0_i32, %c0_i32_0 : i32, i32
  }
  func.func @transform_5(%arg0: i32) -> (i32, i32) {
    %c0_i32 = arith.constant 0 : i32
    %c0_i32_0 = arith.constant 0 : i32
    %c0_i32_1 = arith.constant 0 : i32
    return %c0_i32, %c0_i32_0 : i32, i32
  }
  func.func @transform_6(%arg0: i32) -> (i32, i32) {
    %c0_i32 = arith.constant 0 : i32
    %c0_i32_0 = arith.constant 0 : i32
    %c0_i32_1 = arith.constant 0 : i32
    return %c0_i32, %c0_i32_0 : i32, i32
  }
  func.func @transform_7(%arg0: i32) -> (i32, i32) {
    %c0_i32 = arith.constant 0 : i32
    %c0_i32_0 = arith.constant 0 : i32
    %c0_i32_1 = arith.constant 0 : i32
    return %c0_i32, %c0_i32_0 : i32, i32
  }
  func.func @transform_8(%arg0: i32) -> (i32, i32) {
    %c0_i32 = arith.constant 0 : i32
    %c0_i32_0 = arith.constant 0 : i32
    return %c0_i32, %arg0 : i32, i32
  }
}

</mosaic_0001>

<llo_original>
// kernel: tpu_custom_call.1
$region0: #{tpu_custom_call.1}
  #allocation0 [shape = 'u32[]', space=smem, size = 0x4, offset = 0x4, fixed_abs, tag = 'smem constant byte address 0x4 - core index']
  #allocation1 [shape = 'u32[144,128]{1,0:T(1,128)}', space=vmem, size = 0x12000, scoped, tag = 'internal scratch']
  %s0 = inlined_call_operand.vmem [shape: f32[3,384], index: 0, kind: input, shape index: {}]
  %s1 = inlined_call_operand.vmem [shape: f32[10,1], index: 1, kind: input, shape index: {}]
  %s2 = inlined_call_operand.vmem [shape: f32[20,1], index: 2, kind: input, shape index: {}]
  %s3 = inlined_call_operand.vmem [shape: f32[20,1], index: 3, kind: input, shape index: {}]
  %s4 = inlined_call_operand.vmem [shape: bf16[32,10], index: 4, kind: input, shape index: {}]
  %s5 = inlined_call_operand.vmem [shape: bf16[32,20], index: 5, kind: input, shape index: {}]
  %s6 = inlined_call_operand.vmem [shape: bf16[32,20], index: 6, kind: input, shape index: {}]
  %s7 = inlined_call_operand.vmem [shape: f32[32,1], index: 7, kind: input, shape index: {}]
  %s8 = inlined_call_operand.hbm [shape: f32[32,384], index: 8, kind: output, shape index: {}]
  %s9 = sld [smem:[#allocation0]]
  $region42: #{tpu_custom_call.1} parent=0
    _
  %s11 = ssub.s32 1, %s9
  %s12 = scalar_select 0, %s11, %s9
  $region1: #{tpu_custom_call.1} parent=0
    #allocation2 [shape = 'u8[49152]{0}', space=vmem, size = 0xc000, scoped, tag = 'output window, operand 0, single buffered']
    #allocation3 [shape = 's32[1]{0}', space=sflag, size = 0x4, scoped, tag = 'scoped memory for tpu_custom_call.1']
    %13 = vsyncpa [#allocation3], 0
    // Predicated region
    $region2: #{tpu_custom_call.1} parent=1 // pred_check
      _
    $region3: #{tpu_custom_call.1} parent=1 // pred_check_branch
      %15 = sbr.rel (0) target = $region5
    $region4: #{tpu_custom_call.1} parent=1 // pred_region
      _
    $region5: #{tpu_custom_call.1} parent=1 // pred_fallthru
      _
    // Predicated region
    $region6: #{tpu_custom_call.1} parent=1 // pred_check
      _
    $region7: #{tpu_custom_call.1} parent=1 // pred_check_branch
      %17 = sbr.rel (0) target = $region9
    $region8: #{tpu_custom_call.1} parent=1 // pred_region
      _
    $region9: #{tpu_custom_call.1} parent=1 // pred_fallthru
      _
    // Predicated region
    $region10: #{tpu_custom_call.1} parent=1 // pred_check
      _
    $region11: #{tpu_custom_call.1} parent=1 // pred_check_branch
      %19 = sbr.rel (0) target = $region13
    $region12: #{tpu_custom_call.1} parent=1 // pred_region
      _
    $region13: #{tpu_custom_call.1} parent=1 // pred_fallthru
      _
    // Predicated region
    $region14: #{tpu_custom_call.1} parent=1 // pred_check
      _
    $region15: #{tpu_custom_call.1} parent=1 // pred_check_branch
      %21 = sbr.rel (0) target = $region17
    $region16: #{tpu_custom_call.1} parent=1 // pred_region
      _
    $region17: #{tpu_custom_call.1} parent=1 // pred_fallthru
      _
    // Predicated region
    $region18: #{tpu_custom_call.1} parent=1 // pred_check
      _
    $region19: #{tpu_custom_call.1} parent=1 // pred_check_branch
      %23 = sbr.rel (0) target = $region21
    $region20: #{tpu_custom_call.1} parent=1 // pred_region
      _
    $region21: #{tpu_custom_call.1} parent=1 // pred_fallthru
      _
    // Predicated region
    $region22: #{tpu_custom_call.1} parent=1 // pred_check
      _
    $region23: #{tpu_custom_call.1} parent=1 // pred_check_branch
      %25 = sbr.rel (0) target = $region25
    $region24: #{tpu_custom_call.1} parent=1 // pred_region
      _
    $region25: #{tpu_custom_call.1} parent=1 // pred_fallthru
      _
    // Predicated region
    $region26: #{tpu_custom_call.1} parent=1 // pred_check
      _
    $region27: #{tpu_custom_call.1} parent=1 // pred_check_branch
      %27 = sbr.rel (0) target = $region29
    $region28: #{tpu_custom_call.1} parent=1 // pred_region
      _
    $region29: #{tpu_custom_call.1} parent=1 // pred_fallthru
      _
    // Predicated region
    $region30: #{tpu_custom_call.1} parent=1 // pred_check
      _
    $region31: #{tpu_custom_call.1} parent=1 // pred_check_branch
      %29 = sbr.rel (0) target = $region33
    $region32: #{tpu_custom_call.1} parent=1 // pred_region
      _
    $region33: #{tpu_custom_call.1} parent=1 // pred_fallthru
      _
    %v31 = vld [vmem:[%s0] ss:$4 sm:$0x7]
    %v32 = vmul.f32 %v31, 3.1622777
    %v33 = vld [vmem:[%s1] sm:$0xff]
    %v34 = vld [vmem:[%s1 + $0x8] sm:$0x3]
    %v36 = vlaneseq
    %v37 = vshrl.u32 %v36, 7
    %v38 = vsub.s32 0, %v37
    %v39 = vrot.slane %v32, %v38
    %v40 = vlaneseq
    %v41 = vshrl.u32 %v40, 7
    %v42 = vsub.s32 1, %v41
    %v43 = vrot.slane %v32, %v42
    %v44 = vlaneseq
    %v45 = vshrl.u32 %v44, 7
    %v46 = vsub.s32 2, %v45
    %v47 = vrot.slane %v32, %v46
    %52 = vset.pattern.permute.xlu0 0
    %53 = vperm.xlu0 %52, %v33
    %v54 = vpop.permute.xlu0 %53
    %57 = vset.pattern.permute.xlu0 0
    %58 = vperm.xlu0 %57, %v34
    %v59 = vpop.permute.xlu0 %58
    %v61 = vsub.f32 %v39, %v54
    %v62 = vsub.f32 %v43, %v54
    %v63 = vsub.f32 %v47, %v54
    %v64 = vsub.f32 %v39, %v59
    %v65 = vsub.f32 %v43, %v59
    %v66 = vsub.f32 %v47, %v59
    %v67 = vmul.f32 %v61, %v61
    %v68 = vmul.f32 %v62, %v62
    %v69 = vmul.f32 %v63, %v63
    %v70 = vmul.f32 %v64, %v64
    %v71 = vmul.f32 %v65, %v65
    %v72 = vmul.f32 %v66, %v66
    %v73 = vsub.f32 0.0, %v67
    %v74 = vsub.f32 0.0, %v68
    %v75 = vsub.f32 0.0, %v69
    %v76 = vsub.f32 0.0, %v70
    %v77 = vsub.f32 0.0, %v71
    %v78 = vsub.f32 0.0, %v72
    %v79 = vmul.f32 %v73, 1.442695
    %v80 = vpow.pop %v79
    %v81 = vmul.f32 %v74, 1.442695
    %v82 = vpow.pop %v81
    %v83 = vmul.f32 %v75, 1.442695
    %v84 = vpow.pop %v83
    %v85 = vmul.f32 %v76, 1.442695
    %v86 = vpow.pop %v85
    %v87 = vmul.f32 %v77, 1.442695
    %v88 = vpow.pop %v87
    %v89 = vmul.f32 %v78, 1.442695
    %v90 = vpow.pop %v89
    %v91 = vpack.c.bf16 %v86, %v80
    %v92 = vpack.c.bf16 %v88, %v82
    %v93 = vpack.c.bf16 %v90, %v84
    %v94 = vld [vmem:[%s4] sm:$0xf]
    %v95 = vld [vmem:[%s4 + $0x4] sm:$0xf]
    %v96 = vld [vmem:[%s4 + $0x8] sm:$0xf]
    %v97 = vld [vmem:[%s4 + $0xc] sm:$0xf]
    %s98 = scalar_lea.vmem %s0, 1
    %v99 = vld [vmem:[%s98] ss:$4 sm:$0x7]
    %v100 = vmul.f32 %v99, 3.1622777
    %v101 = vld [vmem:[%s2] sm:$0xff]
    %v102 = vld [vmem:[%s2 + $0x8] sm:$0xff]
    %v103 = vld [vmem:[%s2 + $0x10] sm:$0xf]
    %v105 = vlaneseq
    %v106 = vshrl.u32 %v105, 7
    %v107 = vsub.s32 0, %v106
    %v108 = vrot.slane %v100, %v107
    %v109 = vlaneseq
    %v110 = vshrl.u32 %v109, 7
    %v111 = vsub.s32 1, %v110
    %v112 = vrot.slane %v100, %v111
    %v113 = vlaneseq
    %v114 = vshrl.u32 %v113, 7
    %v115 = vsub.s32 2, %v114
    %v116 = vrot.slane %v100, %v115
    %121 = vset.pattern.permute.xlu0 0
    %122 = vperm.xlu0 %121, %v101
    %v123 = vpop.permute.xlu0 %122
    %126 = vset.pattern.permute.xlu0 0
    %127 = vperm.xlu0 %126, %v102
    %v128 = vpop.permute.xlu0 %127
    %131 = vset.pattern.permute.xlu0 0
    %132 = vperm.xlu0 %131, %v103
    %v133 = vpop.permute.xlu0 %132
    %v135 = vsub.f32 %v108, %v123
    %v136 = vsub.f32 %v112, %v123
    %v137 = vsub.f32 %v116, %v123
    %v138 = vsub.f32 %v108, %v128
    %v139 = vsub.f32 %v112, %v128
    %v140 = vsub.f32 %v116, %v128
    %v141 = vsub.f32 %v108, %v133
    %v142 = vsub.f32 %v112, %v133
    %v143 = vsub.f32 %v116, %v133
    %v144 = vmul.f32 %v135, %v135
    %v145 = vmul.f32 %v136, %v136
    %v146 = vmul.f32 %v137, %v137
    %v147 = vmul.f32 %v138, %v138
    %v148 = vmul.f32 %v139, %v139
    %v149 = vmul.f32 %v140, %v140
    %v150 = vmul.f32 %v141, %v141
    %v151 = vmul.f32 %v142, %v142
    %v152 = vmul.f32 %v143, %v143
    %v153 = vsub.f32 0.0, %v144
    %v154 = vsub.f32 0.0, %v145
    %v155 = vsub.f32 0.0, %v146
    %v156 = vsub.f32 0.0, %v147
    %v157 = vsub.f32 0.0, %v148
    %v158 = vsub.f32 0.0, %v149
    %v159 = vsub.f32 0.0, %v150
    %v160 = vsub.f32 0.0, %v151
    %v161 = vsub.f32 0.0, %v152
    %v162 = vmul.f32 %v153, 1.442695
    %v163 = vpow.pop %v162
    %v164 = vmul.f32 %v154, 1.442695
    %v165 = vpow.pop %v164
    %v166 = vmul.f32 %v155, 1.442695
    %v167 = vpow.pop %v166
    %v168 = vmul.f32 %v156, 1.442695
    %v169 = vpow.pop %v168
    %v170 = vmul.f32 %v157, 1.442695
    %v171 = vpow.pop %v170
    %v172 = vmul.f32 %v158, 1.442695
    %v173 = vpow.pop %v172
    %v174 = vmul.f32 %v159, 1.442695
    %v175 = vpow.pop %v174
    %v176 = vmul.f32 %v160, 1.442695
    %v177 = vpow.pop %v176
    %v178 = vmul.f32 %v161, 1.442695
    %v179 = vpow.pop %v178
    %v180 = vpack.c.bf16 %v169, %v163
    %v181 = vpack.c.bf16 %v171, %v165
    %v182 = vpack.c.bf16 %v173, %v167
    %v183 = vpack.c.bf16 %v175, %v175
    %v184 = vpack.c.bf16 %v177, %v177
    %v185 = vpack.c.bf16 %v179, %v179
    %v186 = vld [vmem:[%s5] sm:$0xf]
    %v187 = vld [vmem:[%s5 + $0x4] sm:$0xf]
    %v188 = vld [vmem:[%s5 + $0x8] sm:$0xf]
    %v189 = vld [vmem:[%s5 + $0xc] sm:$0xf]
    %v194 = vunpack.c.l.b16 %v186
    %v195 = vunpack.c.l.b16 %v187
    %v196 = vunpack.c.l.b16 %v188
    %v197 = vunpack.c.l.b16 %v189
    %v198 = vpack.c.b16 %v195, %v194
    %v199 = vpack.c.b16 %v197, %v196
    %vm200 = vcmask 162816
    %v202 = vsel %vm200, %v198, 0
    %v205 = vsel %vm200, %v199, 0
    %vm207 = vcmask 1041408
    %v209 = vsel %vm207, %v183, 0
    %v212 = vsel %vm207, %v184, 0
    %v215 = vsel %vm207, %v185, 0
    %217 = vmatprep.subr.bf16.mxu0 %v181
    %218 = vmatpush1.bf16.msra.mxu0 %v180
    %219 = vmatprep.subr.bf16.mxu0 %v212
    %220 = vmatpush1.bf16.msra.mxu0 %v209
    %221 = vmatprep.subr.bf16.mxu0 0
    %222 = vmatpush1.bf16.msra.mxu0 0
    %223 = vmatprep.subr.bf16.mxu0 0
    %224 = vmatpush1.bf16.msra.mxu0 0
    %225 = vmatprep.subr.bf16.mxu0 0
    %226 = vmatpush1.bf16.msra.mxu0 0
    %227 = vmatprep.subr.bf16.mxu0 0
    %228 = vmatpush1.bf16.msra.mxu0 0
    %229 = vmatprep.subr.bf16.mxu0 0
    %230 = vmatpush1.bf16.msra.mxu0 0
    %231 = vmatprep.subr.bf16.mxu0 0
    %232 = vmatpush1.bf16.msra.mxu0 0
    %233 = vmatprep.subr.bf16.mxu0 0
    %234 = vmatpush1.bf16.msra.mxu0 0
    %235 = vmatprep.subr.bf16.mxu0 0
    %236 = vmatpush1.bf16.msra.mxu0 0
    %237 = vmatprep.subr.bf16.mxu0 0
    %238 = vmatpush1.bf16.msra.mxu0 0
    %239 = vmatprep.subr.bf16.mxu0 0
    %240 = vmatpush1.bf16.msra.mxu0 0
    %241 = vmatprep.subr.bf16.mxu0 0
    %242 = vmatpush1.bf16.msra.mxu0 0
    %243 = vmatprep.subr.bf16.mxu0 0
    %244 = vmatpush1.bf16.msra.mxu0 0
    %245 = vmatprep.subr.bf16.mxu0 0
    %246 = vmatpush1.bf16.msra.mxu0 0
    %247 = vmatprep.subr.bf16.mxu0 0
    %248 = vmatpush1.bf16.msra.mxu0 0
    %249 = vmatprep.mubr.bf16.mxu0 0
    %250 = vmatmul.mubr.bf16.gmra.mrb[0].mxu0 %v202
    %v251 = vpop.f32.mrb[0].mxu0
    %v252 = vadd.f32 0.0, %v251
    %v253 = vpop.f32.mrb[0].mxu0
    %v254 = vadd.f32 0.0, %v253
    %v255 = vpop.f32.mrb[0].mxu0
    %v256 = vadd.f32 0.0, %v255
    %v257 = vpop.f32.mrb[0].mxu0
    %v258 = vadd.f32 0.0, %v257
    %259 = vmatprep.mubr.bf16.mxu0 0
    %260 = vmatmul.mubr.bf16.gmra.mrb[0].mxu0 %v205
    %v261 = vpop.f32.mrb[0].mxu0
    %v262 = vadd.f32 0.0, %v261
    %v263 = vpop.f32.mrb[0].mxu0
    %v264 = vadd.f32 0.0, %v263
    %v265 = vpop.f32.mrb[0].mxu0
    %v266 = vadd.f32 0.0, %v265
    %v267 = vpop.f32.mrb[0].mxu0
    %v268 = vadd.f32 0.0, %v267
    %269 = vdwg.mxu0
    %270 = vmatprep.subr.bf16.mxu0 0
    %271 = vmatpush1.bf16.msra.mxu0 %v182
    %272 = vmatprep.subr.bf16.mxu0 0
    %273 = vmatpush1.bf16.msra.mxu0 %v215
    %274 = vmatprep.subr.bf16.mxu0 0
    %275 = vmatpush1.bf16.msra.mxu0 0
    %276 = vmatprep.subr.bf16.mxu0 0
    %277 = vmatpush1.bf16.msra.mxu0 0
    %278 = vmatprep.subr.bf16.mxu0 0
    %279 = vmatpush1.bf16.msra.mxu0 0
    %280 = vmatprep.subr.bf16.mxu0 0
    %281 = vmatpush1.bf16.msra.mxu0 0
    %282 = vmatprep.subr.bf16.mxu0 0
    %283 = vmatpush1.bf16.msra.mxu0 0
    %284 = vmatprep.subr.bf16.mxu0 0
    %285 = vmatpush1.bf16.msra.mxu0 0
    %286 = vmatprep.subr.bf16.mxu0 0
    %287 = vmatpush1.bf16.msra.mxu0 0
    %288 = vmatprep.subr.bf16.mxu0 0
    %289 = vmatpush1.bf16.msra.mxu0 0
    %290 = vmatprep.subr.bf16.mxu0 0
    %291 = vmatpush1.bf16.msra.mxu0 0
    %292 = vmatprep.subr.bf16.mxu0 0
    %293 = vmatpush1.bf16.msra.mxu0 0
    %294 = vmatprep.subr.bf16.mxu0 0
    %295 = vmatpush1.bf16.msra.mxu0 0
    %296 = vmatprep.subr.bf16.mxu0 0
    %297 = vmatpush1.bf16.msra.mxu0 0
    %298 = vmatprep.subr.bf16.mxu0 0
    %299 = vmatpush1.bf16.msra.mxu0 0
    %300 = vmatprep.subr.bf16.mxu0 0
    %301 = vmatpush1.bf16.msra.mxu0 0
    %302 = vmatprep.mubr.bf16.mxu0 0
    %303 = vmatmul.mubr.bf16.gmra.mrb[0].mxu0 %v202
    %v304 = vpop.f32.mrb[0].mxu0
    %v305 = vadd.f32 0.0, %v304
    %v306 = vpop.f32.mrb[0].mxu0
    %v307 = vpop.f32.mrb[0].mxu0
    %v308 = vadd.f32 0.0, %v307
    %v309 = vpop.f32.mrb[0].mxu0
    %310 = vmatprep.mubr.bf16.mxu0 0
    %311 = vmatmul.mubr.bf16.gmra.mrb[0].mxu0 %v205
    %v312 = vpop.f32.mrb[0].mxu0
    %v313 = vadd.f32 0.0, %v312
    %v314 = vpop.f32.mrb[0].mxu0
    %v315 = vpop.f32.mrb[0].mxu0
    %v316 = vadd.f32 0.0, %v315
    %v317 = vpop.f32.mrb[0].mxu0
    %318 = vdwg.mxu0
    %v323 = vunpack.c.l.b16 %v94
    %v324 = vunpack.c.l.b16 %v95
    %v325 = vunpack.c.l.b16 %v96
    %v326 = vunpack.c.l.b16 %v97
    %v327 = vpack.c.b16 %v324, %v323
    %v328 = vpack.c.b16 %v326, %v325
    %vm329 = vcmask 80896
    %v331 = vsel %vm329, %v327, 0
    %v334 = vsel %vm329, %v328, 0
    %vm336 = vcmask 1044480
    %v338 = vsel %vm336, %v91, 0
    %v341 = vsel %vm336, %v92, 0
    %v344 = vsel %vm336, %v93, 0
    %346 = vmatprep.subr.bf16.mxu0 %v341
    %347 = vmatpush1.bf16.msra.mxu0 %v338
    %348 = vmatprep.subr.bf16.mxu0 0
    %349 = vmatpush1.bf16.msra.mxu0 0
    %350 = vmatprep.subr.bf16.mxu0 0
    %351 = vmatpush1.bf16.msra.mxu0 0
    %352 = vmatprep.subr.bf16.mxu0 0
    %353 = vmatpush1.bf16.msra.mxu0 0
    %354 = vmatprep.subr.bf16.mxu0 0
    %355 = vmatpush1.bf16.msra.mxu0 0
    %356 = vmatprep.subr.bf16.mxu0 0
    %357 = vmatpush1.bf16.msra.mxu0 0
    %358 = vmatprep.subr.bf16.mxu0 0
    %359 = vmatpush1.bf16.msra.mxu0 0
    %360 = vmatprep.subr.bf16.mxu0 0
    %361 = vmatpush1.bf16.msra.mxu0 0
    %362 = vmatprep.subr.bf16.mxu0 0
    %363 = vmatpush1.bf16.msra.mxu0 0
    %364 = vmatprep.subr.bf16.mxu0 0
    %365 = vmatpush1.bf16.msra.mxu0 0
    %366 = vmatprep.subr.bf16.mxu0 0
    %367 = vmatpush1.bf16.msra.mxu0 0
    %368 = vmatprep.subr.bf16.mxu0 0
    %369 = vmatpush1.bf16.msra.mxu0 0
    %370 = vmatprep.subr.bf16.mxu0 0
    %371 = vmatpush1.bf16.msra.mxu0 0
    %372 = vmatprep.subr.bf16.mxu0 0
    %373 = vmatpush1.bf16.msra.mxu0 0
    %374 = vmatprep.subr.bf16.mxu0 0
    %375 = vmatpush1.bf16.msra.mxu0 0
    %376 = vmatprep.subr.bf16.mxu0 0
    %377 = vmatpush1.bf16.msra.mxu0 0
    %378 = vmatprep.mubr.bf16.mxu0 0
    %379 = vmatmul.mubr.bf16.gmra.mrb[0].mxu0 %v331
    %v380 = vpop.f32.mrb[0].mxu0
    %v381 = vadd.f32 %v252, %v380
    %v382 = vpop.f32.mrb[0].mxu0
    %v383 = vadd.f32 %v254, %v382
    %v384 = vpop.f32.mrb[0].mxu0
    %v385 = vadd.f32 %v256, %v384
    %v386 = vpop.f32.mrb[0].mxu0
    %v387 = vadd.f32 %v258, %v386
    %388 = vmatprep.mubr.bf16.mxu0 0
    %389 = vmatmul.mubr.bf16.gmra.mrb[0].mxu0 %v334
    %v390 = vpop.f32.mrb[0].mxu0
    %v391 = vadd.f32 %v262, %v390
    %v392 = vpop.f32.mrb[0].mxu0
    %v393 = vadd.f32 %v264, %v392
    %v394 = vpop.f32.mrb[0].mxu0
    %v395 = vadd.f32 %v266, %v394
    %v396 = vpop.f32.mrb[0].mxu0
    %v397 = vadd.f32 %v268, %v396
    %398 = vdwg.mxu0
    %399 = vmatprep.subr.bf16.mxu0 0
    %400 = vmatpush1.bf16.msra.mxu0 %v344
    %401 = vmatprep.subr.bf16.mxu0 0
    %402 = vmatpush1.bf16.msra.mxu0 0
    %403 = vmatprep.subr.bf16.mxu0 0
    %404 = vmatpush1.bf16.msra.mxu0 0
    %405 = vmatprep.subr.bf16.mxu0 0
    %406 = vmatpush1.bf16.msra.mxu0 0
    %407 = vmatprep.subr.bf16.mxu0 0
    %408 = vmatpush1.bf16.msra.mxu0 0
    %409 = vmatprep.subr.bf16.mxu0 0
    %410 = vmatpush1.bf16.msra.mxu0 0
    %411 = vmatprep.subr.bf16.mxu0 0
    %412 = vmatpush1.bf16.msra.mxu0 0
    %413 = vmatprep.subr.bf16.mxu0 0
    %414 = vmatpush1.bf16.msra.mxu0 0
    %415 = vmatprep.subr.bf16.mxu0 0
    %416 = vmatpush1.bf16.msra.mxu0 0
    %417 = vmatprep.subr.bf16.mxu0 0
    %418 = vmatpush1.bf16.msra.mxu0 0
    %419 = vmatprep.subr.bf16.mxu0 0
    %420 = vmatpush1.bf16.msra.mxu0 0
    %421 = vmatprep.subr.bf16.mxu0 0
    %422 = vmatpush1.bf16.msra.mxu0 0
    %423 = vmatprep.subr.bf16.mxu0 0
    %424 = vmatpush1.bf16.msra.mxu0 0
    %425 = vmatprep.subr.bf16.mxu0 0
    %426 = vmatpush1.bf16.msra.mxu0 0
    %427 = vmatprep.subr.bf16.mxu0 0
    %428 = vmatpush1.bf16.msra.mxu0 0
    %429 = vmatprep.subr.bf16.mxu0 0
    %430 = vmatpush1.bf16.msra.mxu0 0
    %431 = vmatprep.mubr.bf16.mxu0 0
    %432 = vmatmul.mubr.bf16.gmra.mrb[0].mxu0 %v331
    %v433 = vpop.f32.mrb[0].mxu0
    %v434 = vadd.f32 %v305, %v433
    %v435 = vpop.f32.mrb[0].mxu0
    %v436 = vpop.f32.mrb[0].mxu0
    %v437 = vadd.f32 %v308, %v436
    %v438 = vpop.f32.mrb[0].mxu0
    %439 = vmatprep.mubr.bf16.mxu0 0
    %440 = vmatmul.mubr.bf16.gmra.mrb[0].mxu0 %v334
    %v441 = vpop.f32.mrb[0].mxu0
    %v442 = vadd.f32 %v313, %v441
    %v443 = vpop.f32.mrb[0].mxu0
    %v444 = vpop.f32.mrb[0].mxu0
    %v445 = vadd.f32 %v316, %v444
    %v446 = vpop.f32.mrb[0].mxu0
    %447 = vdwg.mxu0
    %s448 = scalar_lea.vmem %s0, 2
    %v449 = vld [vmem:[%s448] ss:$4 sm:$0x7]
    %v450 = vmul.f32 %v449, 3.1622777
    %v451 = vld [vmem:[%s3] sm:$0xff]
    %v452 = vld [vmem:[%s3 + $0x8] sm:$0xff]
    %v453 = vld [vmem:[%s3 + $0x10] sm:$0xf]
    %v455 = vlaneseq
    %v456 = vshrl.u32 %v455, 7
    %v457 = vsub.s32 0, %v456
    %v458 = vrot.slane %v450, %v457
    %v459 = vlaneseq
    %v460 = vshrl.u32 %v459, 7
    %v461 = vsub.s32 1, %v460
    %v462 = vrot.slane %v450, %v461
    %v463 = vlaneseq
    %v464 = vshrl.u32 %v463, 7
    %v465 = vsub.s32 2, %v464
    %v466 = vrot.slane %v450, %v465
    %471 = vset.pattern.permute.xlu0 0
    %472 = vperm.xlu0 %471, %v451
    %v473 = vpop.permute.xlu0 %472
    %476 = vset.pattern.permute.xlu0 0
    %477 = vperm.xlu0 %476, %v452
    %v478 = vpop.permute.xlu0 %477
    %481 = vset.pattern.permute.xlu0 0
    %482 = vperm.xlu0 %481, %v453
    %v483 = vpop.permute.xlu0 %482
    %v485 = vsub.f32 %v458, %v473
    %v486 = vsub.f32 %v462, %v473
    %v487 = vsub.f32 %v466, %v473
    %v488 = vsub.f32 %v458, %v478
    %v489 = vsub.f32 %v462, %v478
    %v490 = vsub.f32 %v466, %v478
    %v491 = vsub.f32 %v458, %v483
    %v492 = vsub.f32 %v462, %v483
    %v493 = vsub.f32 %v466, %v483
    %v494 = vmul.f32 %v485, %v485
    %v495 = vmul.f32 %v486, %v486
    %v496 = vmul.f32 %v487, %v487
    %v497 = vmul.f32 %v488, %v488
    %v498 = vmul.f32 %v489, %v489
    %v499 = vmul.f32 %v490, %v490
    %v500 = vmul.f32 %v491, %v491
    %v501 = vmul.f32 %v492, %v492
    %v502 = vmul.f32 %v493, %v493
    %v503 = vsub.f32 0.0, %v494
    %v504 = vsub.f32 0.0, %v495
    %v505 = vsub.f32 0.0, %v496
    %v506 = vsub.f32 0.0, %v497
    %v507 = vsub.f32 0.0, %v498
    %v508 = vsub.f32 0.0, %v499
    %v509 = vsub.f32 0.0, %v500
    %v510 = vsub.f32 0.0, %v501
    %v511 = vsub.f32 0.0, %v502
    %v512 = vmul.f32 %v503, 1.442695
    %v513 = vpow.pop %v512
    %v514 = vmul.f32 %v504, 1.442695
    %v515 = vpow.pop %v514
    %v516 = vmul.f32 %v505, 1.442695
    %v517 = vpow.pop %v516
    %v518 = vmul.f32 %v506, 1.442695
    %v519 = vpow.pop %v518
    %v520 = vmul.f32 %v507, 1.442695
    %v521 = vpow.pop %v520
    %v522 = vmul.f32 %v508, 1.442695
    %v523 = vpow.pop %v522
    %v524 = vmul.f32 %v509, 1.442695
    %v525 = vpow.pop %v524
    %v526 = vmul.f32 %v510, 1.442695
    %v527 = vpow.pop %v526
    %v528 = vmul.f32 %v511, 1.442695
    %v529 = vpow.pop %v528
    %v530 = vpack.c.bf16 %v519, %v513
    %v531 = vpack.c.bf16 %v521, %v515
    %v532 = vpack.c.bf16 %v523, %v517
    %v533 = vpack.c.bf16 %v525, %v525
    %v534 = vpack.c.bf16 %v527, %v527
    %v535 = vpack.c.bf16 %v529, %v529
    %v536 = vld [vmem:[%s6] sm:$0xf]
    %v537 = vld [vmem:[%s6 + $0x4] sm:$0xf]
    %v538 = vld [vmem:[%s6 + $0x8] sm:$0xf]
    %v539 = vld [vmem:[%s6 + $0xc] sm:$0xf]
    %v544 = vunpack.c.l.b16 %v536
    %v545 = vunpack.c.l.b16 %v537
    %v546 = vunpack.c.l.b16 %v538
    %v547 = vunpack.c.l.b16 %v539
    %v548 = vpack.c.b16 %v545, %v544
    %v549 = vpack.c.b16 %v547, %v546
    %v551 = vsel %vm200, %v548, 0
    %v554 = vsel %vm200, %v549, 0
    %v557 = vsel %vm207, %v533, 0
    %v560 = vsel %vm207, %v534, 0
    %v563 = vsel %vm207, %v535, 0
    %565 = vmatprep.subr.bf16.mxu0 %v531
    %566 = vmatpush1.bf16.msra.mxu0 %v530
    %567 = vmatprep.subr.bf16.mxu0 %v560
    %568 = vmatpush1.bf16.msra.mxu0 %v557
    %569 = vmatprep.subr.bf16.mxu0 0
    %570 = vmatpush1.bf16.msra.mxu0 0
    %571 = vmatprep.subr.bf16.mxu0 0
    %572 = vmatpush1.bf16.msra.mxu0 0
    %573 = vmatprep.subr.bf16.mxu0 0
    %574 = vmatpush1.bf16.msra.mxu0 0
    %575 = vmatprep.subr.bf16.mxu0 0
    %576 = vmatpush1.bf16.msra.mxu0 0
    %577 = vmatprep.subr.bf16.mxu0 0
    %578 = vmatpush1.bf16.msra.mxu0 0
    %579 = vmatprep.subr.bf16.mxu0 0
    %580 = vmatpush1.bf16.msra.mxu0 0
    %581 = vmatprep.subr.bf16.mxu0 0
    %582 = vmatpush1.bf16.msra.mxu0 0
    %583 = vmatprep.subr.bf16.mxu0 0
    %584 = vmatpush1.bf16.msra.mxu0 0
    %585 = vmatprep.subr.bf16.mxu0 0
    %586 = vmatpush1.bf16.msra.mxu0 0
    %587 = vmatprep.subr.bf16.mxu0 0
    %588 = vmatpush1.bf16.msra.mxu0 0
    %589 = vmatprep.subr.bf16.mxu0 0
    %590 = vmatpush1.bf16.msra.mxu0 0
    %591 = vmatprep.subr.bf16.mxu0 0
    %592 = vmatpush1.bf16.msra.mxu0 0
    %593 = vmatprep.subr.bf16.mxu0 0
    %594 = vmatpush1.bf16.msra.mxu0 0
    %595 = vmatprep.subr.bf16.mxu0 0
    %596 = vmatpush1.bf16.msra.mxu0 0
    %597 = vmatprep.mubr.bf16.mxu0 0
    %598 = vmatmul.mubr.bf16.gmra.mrb[0].mxu0 %v551
    %v599 = vpop.f32.mrb[0].mxu0
    %v600 = vadd.f32 0.0, %v599
    %v601 = vpop.f32.mrb[0].mxu0
    %v602 = vadd.f32 0.0, %v601
    %v603 = vpop.f32.mrb[0].mxu0
    %v604 = vadd.f32 0.0, %v603
    %v605 = vpop.f32.mrb[0].mxu0
    %v606 = vadd.f32 0.0, %v605
    %607 = vmatprep.mubr.bf16.mxu0 0
    %608 = vmatmul.mubr.bf16.gmra.mrb[0].mxu0 %v554
    %v609 = vpop.f32.mrb[0].mxu0
    %v610 = vadd.f32 0.0, %v609
    %v611 = vpop.f32.mrb[0].mxu0
    %v612 = vadd.f32 0.0, %v611
    %v613 = vpop.f32.mrb[0].mxu0
    %v614 = vadd.f32 0.0, %v613
    %v615 = vpop.f32.mrb[0].mxu0
    %v616 = vadd.f32 0.0, %v615
    %617 = vdwg.mxu0
    %618 = vmatprep.subr.bf16.mxu0 0
    %619 = vmatpush1.bf16.msra.mxu0 %v532
    %620 = vmatprep.subr.bf16.mxu0 0
    %621 = vmatpush1.bf16.msra.mxu0 %v563
    %622 = vmatprep.subr.bf16.mxu0 0
    %623 = vmatpush1.bf16.msra.mxu0 0
    %624 = vmatprep.subr.bf16.mxu0 0
    %625 = vmatpush1.bf16.msra.mxu0 0
    %626 = vmatprep.subr.bf16.mxu0 0
    %627 = vmatpush1.bf16.msra.mxu0 0
    %628 = vmatprep.subr.bf16.mxu0 0
    %629 = vmatpush1.bf16.msra.mxu0 0
    %630 = vmatprep.subr.bf16.mxu0 0
    %631 = vmatpush1.bf16.msra.mxu0 0
    %632 = vmatprep.subr.bf16.mxu0 0
    %633 = vmatpush1.bf16.msra.mxu0 0
    %634 = vmatprep.subr.bf16.mxu0 0
    %635 = vmatpush1.bf16.msra.mxu0 0
    %636 = vmatprep.subr.bf16.mxu0 0
    %637 = vmatpush1.bf16.msra.mxu0 0
    %638 = vmatprep.subr.bf16.mxu0 0
    %639 = vmatpush1.bf16.msra.mxu0 0
    %640 = vmatprep.subr.bf16.mxu0 0
    %641 = vmatpush1.bf16.msra.mxu0 0
    %642 = vmatprep.subr.bf16.mxu0 0
    %643 = vmatpush1.bf16.msra.mxu0 0
    %644 = vmatprep.subr.bf16.mxu0 0
    %645 = vmatpush1.bf16.msra.mxu0 0
    %646 = vmatprep.subr.bf16.mxu0 0
    %647 = vmatpush1.bf16.msra.mxu0 0
    %648 = vmatprep.subr.bf16.mxu0 0
    %649 = vmatpush1.bf16.msra.mxu0 0
    %650 = vmatprep.mubr.bf16.mxu0 0
    %651 = vmatmul.mubr.bf16.gmra.mrb[0].mxu0 %v551
    %v652 = vpop.f32.mrb[0].mxu0
    %v653 = vadd.f32 0.0, %v652
    %v654 = vpop.f32.mrb[0].mxu0
    %v655 = vpop.f32.mrb[0].mxu0
    %v656 = vadd.f32 0.0, %v655
    %v657 = vpop.f32.mrb[0].mxu0
    %658 = vmatprep.mubr.bf16.mxu0 0
    %659 = vmatmul.mubr.bf16.gmra.mrb[0].mxu0 %v554
    %v660 = vpop.f32.mrb[0].mxu0
    %v661 = vadd.f32 0.0, %v660
    %v662 = vpop.f32.mrb[0].mxu0
    %v663 = vpop.f32.mrb[0].mxu0
    %v664 = vadd.f32 0.0, %v663
    %v665 = vpop.f32.mrb[0].mxu0
    %666 = vdwg.mxu0
    %v667 = vadd.f32 %v381, %v600
    %v668 = vadd.f32 %v383, %v602
    %v669 = vadd.f32 %v434, %v653
    %v670 = vadd.f32 %v385, %v604
    %v671 = vadd.f32 %v387, %v606
    %v672 = vadd.f32 %v437, %v656
    %v673 = vadd.f32 %v391, %v610
    %v674 = vadd.f32 %v393, %v612
    %v675 = vadd.f32 %v442, %v661
    %v676 = vadd.f32 %v395, %v614
    %v677 = vadd.f32 %v397, %v616
    %v678 = vadd.f32 %v445, %v664
    %v679 = vld [vmem:[%s7] sm:$0xff]
    %v680 = vld [vmem:[%s7 + $0x8] sm:$0xff]
    %v681 = vld [vmem:[%s7 + $0x10] sm:$0xff]
    %v682 = vld [vmem:[%s7 + $0x18] sm:$0xff]
    %684 = vset.pattern.permute.xlu0 0
    %685 = vperm.xlu0 %684, %v679
    %v686 = vpop.permute.xlu0 %685
    %689 = vset.pattern.permute.xlu0 0
    %690 = vperm.xlu0 %689, %v680
    %v691 = vpop.permute.xlu0 %690
    %694 = vset.pattern.permute.xlu0 0
    %695 = vperm.xlu0 %694, %v681
    %v696 = vpop.permute.xlu0 %695
    %699 = vset.pattern.permute.xlu0 0
    %700 = vperm.xlu0 %699, %v682
    %v701 = vpop.permute.xlu0 %700
    %v703 = vadd.f32 %v667, %v686
    %v704 = vadd.f32 %v668, %v686
    %v705 = vadd.f32 %v669, %v686
    %v706 = vadd.f32 %v670, %v691
    %v707 = vadd.f32 %v671, %v691
    %v708 = vadd.f32 %v672, %v691
    %v709 = vadd.f32 %v673, %v696
    %v710 = vadd.f32 %v674, %v696
    %v711 = vadd.f32 %v675, %v696
    %v712 = vadd.f32 %v676, %v701
    %v713 = vadd.f32 %v677, %v701
    %v714 = vadd.f32 %v678, %v701
    %715 = vst [vmem:[#allocation2] sm:$0xff] %v703
    %716 = vst [vmem:[#allocation2 + $0x8] sm:$0xff] %v704
    %717 = vst [vmem:[#allocation2 + $0x10] sm:$0xff] %v705
    %718 = vst [vmem:[#allocation2 + $0x18] sm:$0xff] %v706
    %719 = vst [vmem:[#allocation2 + $0x20] sm:$0xff] %v707
    %720 = vst [vmem:[#allocation2 + $0x28] sm:$0xff] %v708
    %721 = vst [vmem:[#allocation2 + $0x30] sm:$0xff] %v709
    %722 = vst [vmem:[#allocation2 + $0x38] sm:$0xff] %v710
    %723 = vst [vmem:[#allocation2 + $0x40] sm:$0xff] %v711
    %724 = vst [vmem:[#allocation2 + $0x48] sm:$0xff] %v712
    %725 = vst [vmem:[#allocation2 + $0x50] sm:$0xff] %v713
    %726 = vst [vmem:[#allocation2 + $0x58] sm:$0xff] %v714
    // Predicated region
    $region34: #{tpu_custom_call.1} parent=1 // pred_check
      _
    $region35: #{tpu_custom_call.1} parent=1 // pred_check_branch
      %728 = sbr.rel (0) target = $region37
    $region36: #{tpu_custom_call.1} parent=1 // pred_region
      %s730 = ssub.s32 1536, 1536
      %731 = vsyncadd [#allocation3], %s730
      %s732 = sshll.u32 [#allocation2], 4
      %s733 = int_to_ptr.vmem [resolvable:$true] %s732
      %738 = dma.vmem_to_hbm [thread:$0]  %s733, 1536, %s8, [#allocation3], 384, 384, 24
    $region37: #{tpu_custom_call.1} parent=1 // pred_fallthru
      _
    // Predicated region
    $region38: #{tpu_custom_call.1} parent=1 // pred_check
      _
    $region39: #{tpu_custom_call.1} parent=1 // pred_check_branch
      %740 = sbr.rel (0) target = $region41
    $region40: #{tpu_custom_call.1} parent=1 // pred_region
      %741 = dma.done [#allocation3], 1536
    $region41: #{tpu_custom_call.1} parent=1 // pred_fallthru
      _
    %742 = vsyncpa [#allocation3], 1

</llo_original>
